<compile_context>
chip_gen: v5e
topology: v5e:2x2
jax: 0.10.0
libtpu: 0.0.40
codegen_flags: <defaults>
</compile_context>

<pallas_src>
import functools

import jax
import jax.numpy as jnp
from jax import lax
from jax.experimental import pallas as pl
from jax.experimental.pallas import tpu as pltpu


def _sum_term(v, needs_select):
    """f32 contribution of one window-element slab to the running sum."""
    vf = v.astype(jnp.float32)
    if needs_select:
        # -inf marks spatial padding (shared with the max path); avg pads with 0.
        return jnp.where(v == -jnp.inf, 0.0, vf)
    return vf


def _mixpool_fused_kernel(alpha_ref, x_ref, o_ref, *, k, wp, wc, select_mask):
    """Fused path (stride == kernel_size).

    x_ref: (1, t_ho, k*wp)  block row r = the k input rows of output row r,
                            concatenated along lanes.
    o_ref: (1, t_ho, wc)    valid results live at lane positions ow*k.
    """
    a = alpha_ref[0]
    c = (1.0 - a) * (1.0 / (k * k))          # folded avg coefficient

    mx = None
    sm = None
    for kh in range(k):                      # k*k is small & static
        for kw in range(k):
            off = kh * wp + kw
            xi = x_ref[0, :, off:off + wc]   # (t_ho, wc) static lane-offset slice
            sel = select_mask[kh * k + kw]
            if mx is None:
                mx = xi
                sm = _sum_term(xi, sel)
            else:
                mx = jnp.maximum(mx, xi)
                sm = sm + _sum_term(xi, sel)

    out = a * mx.astype(jnp.float32) + c * sm
    o_ref[0] = out.astype(o_ref.dtype)


def _mixpool_planes_kernel(alpha_ref, x_ref, o_ref, *, kk, select_mask):
    """Fallback path (k != s): wrapper-gathered window planes.

    x_ref: (1, kk, t_ho, Wo); o_ref: (1, t_ho, Wo).
    """
    a = alpha_ref[0]
    c = (1.0 - a) * (1.0 / kk)

    x0 = x_ref[0, 0]
    mx = x0
    sm = _sum_term(x0, select_mask[0])
    for i in range(1, kk):
        xi = x_ref[0, i]
        mx = jnp.maximum(mx, xi)
        sm = sm + _sum_term(xi, select_mask[i])

    out = a * mx.astype(jnp.float32) + c * sm
    o_ref[0] = out.astype(o_ref.dtype)


def _vmem_budget_and_limit():
    """Generation-aware tile budget / vmem_limit_bytes (v5e/v6e: 128 MiB, v7x: 64 MiB)."""
    try:
        cap = pltpu.get_tpu_info().vmem_capacity_bytes
    except Exception:                        # conservative fallback
        cap = 64 * 1024 * 1024
    if cap >= 96 * 1024 * 1024:              # v5e / v6e
        return 24 * 1024 * 1024, 64 * 1024 * 1024
    limit = min(48 * 1024 * 1024, (cap * 3) // 4)   # v7x: 64 MiB physical per TC
    return (limit * 3) // 5, limit


def _sublane(dtype):
    return {4: 8, 2: 16, 1: 32}.get(jnp.dtype(dtype).itemsize, 8)


def _pick_t_ho(Ho, per_row_bytes, budget, sub, nc):
    """Largest legal Ho-tile fitting the VMEM budget (dtype-aware sublane rounding)."""
    t = max(1, budget // max(1, per_row_bytes))
    if nc == 1 and Ho > sub:
        # v7x megacore: keep the grid >= 2 steps so both TensorCores get work.
        half = -(-Ho // 2)
        t = min(t, -(-half // sub) * sub)
    if t >= Ho:
        return Ho                            # full dim: always a legal block dim
    t = (t // sub) * sub
    return max(t, min(Ho, sub))


def mixpool(x_nchw, alpha, kernel_size, stride, padding):
    k, s, p = int(kernel_size), int(stride), int(padding)
    N, C, H, W = x_nchw.shape
    Ho = (H + 2 * p - k) // s + 1
    Wo = (W + 2 * p - k) // s + 1
    kk = k * k
    NC = N * C
    dtype = x_nchw.dtype
    isz = jnp.dtype(dtype).itemsize
    sub = _sublane(dtype)
    budget, vmem_limit = _vmem_budget_and_limit()

    alpha_f32 = jnp.asarray(alpha, jnp.float32).reshape(1)

    # Free reshape: keeps NCHW element order, gives the (N*C) grid axis.
    x3 = x_nchw.reshape(NC, H, W)
    if p > 0:
        # -inf pad matches F.max_pool2d; the sum path zeroes it in-kernel.
        # TODO(synk): inputs legitimately containing -inf/NaN with p > 0 diverge from
        # PyTorch on the avg path (treated as 0 instead of propagating).
        x3 = jnp.pad(x3, ((0, 0), (p, p), (p, p)), constant_values=-jnp.inf)
    Hp, Wp = H + 2 * p, W + 2 * p

    def needs_select(kh, kw):
        if p == 0:
            return False
        row = (kh < p) or (kh >= H + p - (Ho - 1) * s)
        col = (kw < p) or (kw >= W + p - (Wo - 1) * s)
        return row or col

    select_mask = tuple(needs_select(kh, kw) for kh in range(k) for kw in range(k))

    params = pltpu.CompilerParams(
        dimension_semantics=("parallel", "parallel"),
        vmem_limit_bytes=vmem_limit,
    )

    if s == k:
        # ---------- fully fused path: no window-plane tensor, no transposes ----------
        if Hp != Ho * k:                      # only when H isn't a multiple of k
            x3 = x3[:, :Ho * k, :]
        xr = x3.reshape(NC, Ho, k * Wp)       # free reshape (row-major merge)
        wc = (Wo - 1) * k + 1                 # lane width covering all valid columns

        per_row = 2 * k * Wp * isz + 2 * wc * isz + 6 * wc * 4
        t_ho = _pick_t_ho(Ho, per_row, budget, sub, NC)
        grid = (NC, pl.cdiv(Ho, t_ho))

        res = pl.pallas_call(
            functools.partial(_mixpool_fused_kernel, k=k, wp=Wp, wc=wc,
                              select_mask=select_mask),
            out_shape=jax.ShapeDtypeStruct((NC, Ho, wc), dtype),
            grid=grid,
            in_specs=[
                pl.BlockSpec(memory_space=pltpu.MemorySpace.SMEM),            # alpha
                pl.BlockSpec((1, t_ho, k * Wp), lambda nc, h: (nc, h, 0)),
            ],
            out_specs=pl.BlockSpec((1, t_ho, wc), lambda nc, h: (nc, h, 0)),
            compiler_params=params,
        )(alpha_f32, xr)
        out = res[:, :, ::k]                  # keep columns ow*k -> (NC, Ho, Wo)
    else:
        # ---------- fallback (k != s): window planes, (N*C)-leading layout ----------
        planes = [
            x3[:, kh:kh + s * (Ho - 1) + 1:s, kw:kw + s * (Wo - 1) + 1:s]
            for kh in range(k) for kw in range(k)
        ]
        xw = jnp.stack(planes, axis=1)        # (NC, kk, Ho, Wo)

        per_row = 2 * kk * Wo * isz + 2 * Wo * isz + 6 * Wo * 4
        t_ho = _pick_t_ho(Ho, per_row, budget, sub, NC)
        grid = (NC, pl.cdiv(Ho, t_ho))

        out = pl.pallas_call(
            functools.partial(_mixpool_planes_kernel, kk=kk,
                              select_mask=select_mask),
            out_shape=jax.ShapeDtypeStruct((NC, Ho, Wo), dtype),
            grid=grid,
            in_specs=[
                pl.BlockSpec(memory_space=pltpu.MemorySpace.SMEM),            # alpha
                pl.BlockSpec((1, kk, t_ho, Wo), lambda nc, h: (nc, 0, h, 0)),
            ],
            out_specs=pl.BlockSpec((1, t_ho, Wo), lambda nc, h: (nc, h, 0)),
            compiler_params=params,
        )(alpha_f32, xw)

    return out.reshape(N, C, Ho, Wo)


def mixpool_ref(x, alpha, k, s, p):
    """Pure-JAX reference matching F.max_pool2d / F.avg_pool2d defaults."""
    pad = [(0, 0), (0, 0), (p, p), (p, p)]
    mx = lax.reduce_window(x, -jnp.inf, lax.max, (1, 1, k, k), (1, 1, s, s), pad)
    sm = lax.reduce_window(x, 0.0, lax.add, (1, 1, k, k), (1, 1, s, s), pad)
    a = alpha[0]
    return a * mx + (1.0 - a) * sm / (k * k)


if __name__ == "__main__":
    key = jax.random.PRNGKey(0)
    x = jax.random.normal(key, (2, 4, 16, 16), dtype=jnp.float32)   # NCHW like PyTorch
    alpha = jnp.array([0.6], dtype=jnp.float32)                     # nn.Parameter([alpha])

    # (kernel_size, stride, padding): fused s==k (unpadded & padded) + k!=s fallback.
    for (k, s, p) in [(2, 2, 0), (3, 3, 1), (3, 2, 1)]:
        out = jax.block_until_ready(mixpool(x, alpha, k, s, p))
        ref = mixpool_ref(x, alpha, k, s, p)
        assert out.shape == ref.shape, (k, s, p, out.shape, ref.shape)
        assert jnp.allclose(out, ref, atol=1e-5, rtol=1e-5), (k, s, p)

    # Primary module configuration.
    out = jax.block_until_ready(mixpool(x, alpha, 2, 2, 0))
    assert out.shape == (2, 4, 8, 8)
    assert jnp.allclose(out, mixpool_ref(x, alpha, 2, 2, 0), atol=1e-5, rtol=1e-5)

    print("KERNEL_OK")
</pallas_src>

<mosaic_0001>
module attributes {stable_mosaic.version = 11 : i64} {
  func.func @_mixpool_fused_kernel(%arg0: i32, %arg1: i32, %arg2: memref<1xf32, #tpu.memory_space<smem>>, %arg3: memref<1x8x32xf32, #tpu.memory_space<vmem>>, %arg4: memref<1x8x15xf32, #tpu.memory_space<vmem>>) attributes {dimension_semantics = [#tpu.dimension_semantics<parallel>, #tpu.dimension_semantics<parallel>], iteration_bounds = array<i64: 8, 1>, scalar_prefetch = 0 : i64, scratch_operands = 0 : i64, tpu.core_type = #tpu.core_type<tc>, window_params = [{transform_indices = @transform_0, window_bounds = array<i64: 1>}, {transform_indices = @transform_1, window_bounds = array<i64: 1, 8, 32>}, {transform_indices = @transform_2, window_bounds = array<i64: 1, 8, 15>}]} {
    %c0 = arith.constant 0 : index
    %0 = memref.load %arg2[%c0] : memref<1xf32, #tpu.memory_space<smem>>
    %cst = arith.constant 1.000000e+00 : f32
    %1 = arith.subf %cst, %0 : f32
    %cst_0 = arith.constant 2.500000e-01 : f32
    %2 = arith.mulf %1, %cst_0 : f32
    %c0_1 = arith.constant 0 : index
    %c0_2 = arith.constant 0 : index
    %c0_3 = arith.constant 0 : index
    %3 = vector.load %arg3[%c0_1, %c0_2, %c0_3] : memref<1x8x32xf32, #tpu.memory_space<vmem>>, vector<1x8x15xf32>
    %4 = vector.shape_cast %3 : vector<1x8x15xf32> to vector<8x15xf32>
    %c0_4 = arith.constant 0 : index
    %c0_5 = arith.constant 0 : index
    %c1 = arith.constant 1 : index
    %5 = vector.load %arg3[%c0_4, %c0_5, %c1] : memref<1x8x32xf32, #tpu.memory_space<vmem>>, vector<1x8x15xf32>
    %6 = vector.shape_cast %5 : vector<1x8x15xf32> to vector<8x15xf32>
    %7 = arith.maximumf %4, %6 : vector<8x15xf32>
    %8 = arith.addf %4, %6 : vector<8x15xf32>
    %c0_6 = arith.constant 0 : index
    %c0_7 = arith.constant 0 : index
    %c16 = arith.constant 16 : index
    %9 = vector.load %arg3[%c0_6, %c0_7, %c16] : memref<1x8x32xf32, #tpu.memory_space<vmem>>, vector<1x8x15xf32>
    %10 = vector.shape_cast %9 : vector<1x8x15xf32> to vector<8x15xf32>
    %11 = arith.maximumf %7, %10 : vector<8x15xf32>
    %12 = arith.addf %8, %10 : vector<8x15xf32>
    %c0_8 = arith.constant 0 : index
    %c0_9 = arith.constant 0 : index
    %c17 = arith.constant 17 : index
    %13 = vector.load %arg3[%c0_8, %c0_9, %c17] : memref<1x8x32xf32, #tpu.memory_space<vmem>>, vector<1x8x15xf32>
    %14 = vector.shape_cast %13 : vector<1x8x15xf32> to vector<8x15xf32>
    %15 = arith.maximumf %11, %14 : vector<8x15xf32>
    %16 = arith.addf %12, %14 : vector<8x15xf32>
    %17 = vector.broadcast %0 : f32 to vector<8x15xf32>
    %18 = arith.mulf %17, %15 : vector<8x15xf32>
    %19 = vector.broadcast %2 : f32 to vector<8x15xf32>
    %20 = arith.mulf %19, %16 : vector<8x15xf32>
    %21 = arith.addf %18, %20 : vector<8x15xf32>
    %c0_10 = arith.constant 0 : index
    %c0_11 = arith.constant 0 : index
    %c0_12 = arith.constant 0 : index
    %22 = vector.load %arg4[%c0_10, %c0_11, %c0_12] : memref<1x8x15xf32, #tpu.memory_space<vmem>>, vector<1x8x15xf32>
    %23 = vector.shape_cast %22 : vector<1x8x15xf32> to vector<8x15xf32>
    %24 = vector.shape_cast %21 : vector<8x15xf32> to vector<1x8x15xf32>
    tpu.vector_store %arg4[%c0_10, %c0_11, %c0_12], %24 {strides = array<i32>} : memref<1x8x15xf32, #tpu.memory_space<vmem>>, vector<1x8x15xf32>,
    return
  }
  func.func @transform_0(%arg0: i32, %arg1: i32) -> i32 {
    %c0_i32 = arith.constant 0 : i32
    %c0_i32_0 = arith.constant 0 : i32
    return %c0_i32 : i32
  }
  func.func @transform_1(%arg0: i32, %arg1: i32) -> (i32, i32, i32) {
    %c0_i32 = arith.constant 0 : i32
    %c0_i32_0 = arith.constant 0 : i32
    return %arg0, %arg1, %c0_i32 : i32, i32, i32
  }
  func.func @transform_2(%arg0: i32, %arg1: i32) -> (i32, i32, i32) {
    %c0_i32 = arith.constant 0 : i32
    %c0_i32_0 = arith.constant 0 : i32
    return %arg0, %arg1, %c0_i32 : i32, i32, i32
  }
}

</mosaic_0001>

<llo_original>
// kernel: tpu_custom_call.1
$region0: #{tpu_custom_call.1}
  #allocation0 [shape = 'u32[]', space=smem, size = 0x4, offset = 0x4, fixed_abs, tag = 'smem constant byte address 0x4 - core index']
  #allocation1 [shape = 'u32[72,128]{1,0:T(1,128)}', space=vmem, size = 0x9000, scoped, tag = 'internal scratch']
  #allocation2 [shape = 'f32[1]{0:T(128)S(6)}', space=smem, size = 0x200, scoped, tag = 'scoped memory for tpu_custom_call.1']
  %s0 = inlined_call_operand.<no memory space> [shape: f32[1], index: 0, kind: input, shape index: {}]
  %s1 = inlined_call_operand.hbm [shape: f32[8,8,32], index: 1, kind: input, shape index: {}]
  %s2 = inlined_call_operand.hbm [shape: f32[8,8,15], index: 2, kind: output, shape index: {}]
  %s3 = sld [smem:[#allocation0]]
  $region45: #{tpu_custom_call.1} parent=0
    _
  %s5 = ssub.s32 1, %s3
  %s6 = scalar_select 0, %s5, %s3
  %7 = sst [smem:[#allocation2]] %s0
  $region1: #{tpu_custom_call.1} parent=0
    #allocation3 [shape = 'u8[8192]{0}', space=vmem, size = 0x2000, scoped, tag = 'input window, operand 1']
    #allocation4 [shape = 's32[2]{0}', space=sflag, size = 0x8, scoped, tag = 'scoped memory for tpu_custom_call.1']
    #allocation5 [shape = 's32[2]{0}', space=sflag, size = 0x8, scoped, tag = 'scoped memory for tpu_custom_call.1']
    #allocation6 [shape = 'u8[8192]{0}', space=vmem, size = 0x2000, scoped, tag = 'output window, operand 0']
    %8 = vsyncpa [#allocation4], 0
    %s9 = scalar_lea.sflag [#allocation4], 1
    %10 = vsyncpa %s9, 0
    %11 = vsyncpa [#allocation5], 0
    %s12 = scalar_lea.sflag [#allocation5], 1
    %13 = vsyncpa %s12, 0
    loop: start=0, step=1, limit=10
    $region2: #{tpu_custom_call.1} parent=1 // loop_pre_header
      _
    $region3: #{tpu_custom_call.1} parent=1 // loop_header
      %s15 = sphi 0, %s19
      %p16 = scmp.ge.s32.totalorder %s15, 10
      %s22 = sphi 0, %s34
      %s23 = sphi 0, %s30
      %s24 = sphi 0, %s22
      %s25 = sphi 0, %s23
      %s26 = sphi 0, %s24
      %s27 = sphi 0, %s25
      %s35 = sphi 0, %s35
      %s37 = sphi 0, %s35
      %s38 = sphi 0, %s37
      %s52 = sphi 0, %s38
      %s60 = sphi 0, %s62
      %s63 = sphi 0, %s60
      %s64 = sphi 0, %s63
      %s80 = sphi 0, %s64
      %s88 = sphi 0, %s90
      %s91 = sphi 0, %s88
      %s92 = sphi 0, %s91
      %s108 = sphi 0, %s92
    $region4: #{tpu_custom_call.1} parent=1 // loop_header_branch
      %18 = sbr.rel (%p16) target = $region8
    $region5: #{tpu_custom_call.1} parent=1 // loop_body
      %s20 = ssub.s32 %s15, 1
      %s21 = ssub.s32 %s15, 2
      %s28 = sadd.s32 1, %s23
      %p29 = scmp.ge.s32.totalorder %s28, 1
      %s30 = scalar_select %p29, 0, %s28
      %s31 = sadd.s32 1, %s22
      %s32 = scalar_select %p29, %s31, %s22
      %p33 = scmp.ge.s32.totalorder %s32, 8
      %s34 = scalar_select %p33, 0, %s32
      %s36 = sadd.s32 %s35, 1
      %p39 = scmp.eq.s32.totalorder %s15, 7
      %p40 = scmp.ne.s32.totalorder %s35, %s37
      %p41 = scmp.eq.s32.totalorder %s15, 0
      %p42 = por %p40, %p41
      %p43 = scmp.ne.s32.totalorder %s35, %s37
      %p44 = scmp.eq.s32.totalorder %s20, 7
      %p45 = por %p43, %p44
      %p46 = scmp.ne.s32.totalorder %s37, %s38
      %p47 = scmp.eq.s32.totalorder %s20, 0
      %p48 = por %p46, %p47
      %p49 = scmp.ne.s32.totalorder %s37, %s38
      %p50 = scmp.eq.s32.totalorder %s21, 7
      %p51 = por %p49, %p50
      %p53 = scmp.ne.s32.totalorder %s38, %s52
      %p54 = scmp.eq.s32.totalorder %s21, 0
      %p55 = por %p53, %p54
      %s56 = ssub.s32 %s22, %s34
      %s57 = ssub.s32 %s23, %s30
      %s58 = sor.u32 %s56, %s57
      %p59 = scmp.eq.s32.totalorder %s58, 0
      %s61 = sadd.s32 %s60, 1
      %s62 = scalar_select %p59, %s60, %s61
      %p65 = pneg %p59
      %p66 = scmp.eq.s32.totalorder %s15, 7
      %p67 = por %p65, %p66
      %p68 = scmp.ne.s32.totalorder %s60, %s63
      %p69 = scmp.eq.s32.totalorder %s15, 0
      %p70 = por %p68, %p69
      %p71 = scmp.ne.s32.totalorder %s60, %s63
      %p72 = scmp.eq.s32.totalorder %s20, 7
      %p73 = por %p71, %p72
      %p74 = scmp.ne.s32.totalorder %s63, %s64
      %p75 = scmp.eq.s32.totalorder %s20, 0
      %p76 = por %p74, %p75
      %p77 = scmp.ne.s32.totalorder %s63, %s64
      %p78 = scmp.eq.s32.totalorder %s21, 7
      %p79 = por %p77, %p78
      %p81 = scmp.ne.s32.totalorder %s64, %s80
      %p82 = scmp.eq.s32.totalorder %s21, 0
      %p83 = por %p81, %p82
      %s84 = ssub.s32 %s22, %s34
      %s85 = ssub.s32 %s23, %s30
      %s86 = sor.u32 %s84, %s85
      %p87 = scmp.eq.s32.totalorder %s86, 0
      %s89 = sadd.s32 %s88, 1
      %s90 = scalar_select %p87, %s88, %s89
      %p93 = pneg %p87
      %p94 = scmp.eq.s32.totalorder %s15, 7
      %p95 = por %p93, %p94
      %p96 = scmp.ne.s32.totalorder %s88, %s91
      %p97 = scmp.eq.s32.totalorder %s15, 0
      %p98 = por %p96, %p97
      %p99 = scmp.ne.s32.totalorder %s88, %s91
      %p100 = scmp.eq.s32.totalorder %s20, 7
      %p101 = por %p99, %p100
      %p102 = scmp.ne.s32.totalorder %s91, %s92
      %p103 = scmp.eq.s32.totalorder %s20, 0
      %p104 = por %p102, %p103
      %p105 = scmp.ne.s32.totalorder %s91, %s92
      %p106 = scmp.eq.s32.totalorder %s21, 7
      %p107 = por %p105, %p106
      %p109 = scmp.ne.s32.totalorder %s92, %s108
      %p110 = scmp.eq.s32.totalorder %s21, 0
      %p111 = por %p109, %p110
      %p112 = scmp.le.s32.totalorder 1, %s15
      %p113 = scmp.lt.s32.totalorder %s15, 9
      %p114 = pnand %p112, %p113
      %p115 = pneg %p114
      // Predicated region
      $region9: #{tpu_custom_call.1} parent=5 // pred_check
        _
      $region10: #{tpu_custom_call.1} parent=5 // pred_check_branch
        %117 = sbr.rel (%p114) target = $region12
      $region11: #{tpu_custom_call.1} parent=5 // pred_region
        %s118 = ssub.s32 %s15, 1
        // Predicated region
        $region13: #{tpu_custom_call.1} parent=11 // pred_check
          %p119 = pneg %p48
        $region14: #{tpu_custom_call.1} parent=11 // pred_check_branch
          %121 = sbr.rel (%p119) target = $region16
        $region15: #{tpu_custom_call.1} parent=11 // pred_region
          _
        $region16: #{tpu_custom_call.1} parent=11 // pred_fallthru
          _
      $region12: #{tpu_custom_call.1} parent=5 // pred_fallthru
        _
      %p122 = scmp.lt.s32.totalorder %s15, 8
      // Predicated region
      $region17: #{tpu_custom_call.1} parent=5 // pred_check
        %p123 = pneg %p122
      $region18: #{tpu_custom_call.1} parent=5 // pred_check_branch
        %125 = sbr.rel (%p123) target = $region20
      $region19: #{tpu_custom_call.1} parent=5 // pred_region
        // Predicated region
        $region21: #{tpu_custom_call.1} parent=19 // pred_check
          %p126 = pneg %p70
        $region22: #{tpu_custom_call.1} parent=19 // pred_check_branch
          %128 = sbr.rel (%p126) target = $region24
        $region23: #{tpu_custom_call.1} parent=19 // pred_region
          %s129 = sand.u32 %s60, 1
          %s130 = scalar_lea.sflag [#allocation4], %s129
          %s131 = sand.u32 %s60, 1
          %s132 = smul.addr %s131, 8
          %s133 = scalar_lea.vmem [#allocation3], %s132
          %135 = vsyncadd %s130, 0
          %s136 = sadd.s32 %s23, %s22
          %s137 = smul.addr %s136, 8
          %s138 = scalar_lea.hbm %s1, %s137
          %s140 = sshll.u32 %s138, 4
          %s141 = int_to_ptr.hbm [resolvable:$true] %s140
          %s142 = sshll.u32 %s133, 4
          %s143 = int_to_ptr.vmem [resolvable:$true] %s142
          %145 = dma.hbm_to_vmem [thread:$0]  %s141, 128, %s143, %s130
        $region24: #{tpu_custom_call.1} parent=19 // pred_fallthru
          _
      $region20: #{tpu_custom_call.1} parent=5 // pred_fallthru
        _
      %p146 = scmp.le.s32.totalorder 1, %s15
      %p147 = scmp.lt.s32.totalorder %s15, 9
      %p148 = pnand %p146, %p147
      %p149 = pneg %p148
      // Predicated region
      $region25: #{tpu_custom_call.1} parent=5 // pred_check
        _
      $region26: #{tpu_custom_call.1} parent=5 // pred_check_branch
        %151 = sbr.rel (%p148) target = $region28
      $region27: #{tpu_custom_call.1} parent=5 // pred_region
        %s152 = ssub.s32 %s15, 1
        %s153 = sand.u32 %s63, 1
        %s154 = scalar_lea.sflag [#allocation4], %s153
        %s155 = sand.u32 %s63, 1
        %s156 = smul.addr %s155, 8
        %s157 = scalar_lea.vmem [#allocation3], %s156
        // Predicated region
        $region29: #{tpu_custom_call.1} parent=27 // pred_check
          %p158 = pneg %p76
        $region30: #{tpu_custom_call.1} parent=27 // pred_check_branch
          %160 = sbr.rel (%p158) target = $region32
        $region31: #{tpu_custom_call.1} parent=27 // pred_region
          %162 = dma.done %s154, 128
        $region32: #{tpu_custom_call.1} parent=27 // pred_fallthru
          _
        %p163 = pneg %p48
        %p164 = pneg %p45
        %s165 = sand.u32 %s63, 1
        %s166 = scalar_lea.sflag [#allocation4], %s165
        %s167 = sand.u32 %s63, 1
        %s168 = smul.addr %s167, 8
        %s169 = scalar_lea.vmem [#allocation3], %s168
        %p170 = pneg %p76
        %p171 = pneg %p73
        %p172 = pneg %p104
        %p173 = pneg %p101
        %s174 = sand.u32 %s91, 1
        %s175 = scalar_lea.sflag [#allocation5], %s174
        %s176 = sand.u32 %s91, 1
        %s177 = smul.addr %s176, 8
        %s178 = scalar_lea.vmem [#allocation6], %s177
        %s179 = sld [smem:[#allocation2]]
        %s180 = ssub.f32 1.0, %s179
        %s181 = smul.f32 %s180, 0.25
        %v182 = vld [vmem:[%s157] sm:$0xff]
        %184 = vrot.lane.b32.xlu0 %v182, 127
        %v185 = vpop.permute.xlu0 %184
        %v187 = vmax.f32 %v182, %v185
        %v188 = vadd.f32 %v182, %v185
        %189 = vrot.lane.b32.xlu0 %v182, 112
        %v190 = vpop.permute.xlu0 %189
        %v192 = vmax.f32 %v187, %v190
        %v193 = vadd.f32 %v188, %v190
        %194 = vrot.lane.b32.xlu0 %v182, 111
        %v195 = vpop.permute.xlu0 %194
        %v197 = vmax.f32 %v192, %v195
        %v198 = vadd.f32 %v193, %v195
        %v199 = vstv %s179
        %v200 = vmul.f32 %v199, %v197
        %v201 = vstv %s181
        %v202 = vmul.f32 %v201, %v198
        %v203 = vadd.f32 %v200, %v202
        %vm204 = vcmask 121856
        %205 = vst.msk [vmem:[%s178] sm:$0xff] %vm204, %v203
        %s206 = sand.u32 %s91, 1
        %s207 = scalar_lea.sflag [#allocation5], %s206
        %s208 = sand.u32 %s91, 1
        %s209 = smul.addr %s208, 8
        %s210 = scalar_lea.vmem [#allocation6], %s209
        // Predicated region
        $region33: #{tpu_custom_call.1} parent=27 // pred_check
          %p211 = pneg %p101
        $region34: #{tpu_custom_call.1} parent=27 // pred_check_branch
          %213 = sbr.rel (%p211) target = $region36
        $region35: #{tpu_custom_call.1} parent=27 // pred_region
          %215 = vsyncadd %s207, 0
          %s216 = sadd.s32 %s25, %s24
          %s217 = smul.addr %s216, 8
          %s218 = scalar_lea.hbm %s2, %s217
          %s220 = sshll.u32 %s210, 4
          %s221 = int_to_ptr.vmem [resolvable:$true] %s220
          %s222 = sshll.u32 %s218, 4
          %s223 = int_to_ptr.hbm [resolvable:$true] %s222
          %225 = dma.vmem_to_hbm [thread:$0]  %s221, 128, %s223, %s207
        $region36: #{tpu_custom_call.1} parent=27 // pred_fallthru
          _
      $region28: #{tpu_custom_call.1} parent=5 // pred_fallthru
        _
      %p226 = scmp.le.s32.totalorder 2, %s15
      // Predicated region
      $region37: #{tpu_custom_call.1} parent=5 // pred_check
        %p227 = pneg %p226
      $region38: #{tpu_custom_call.1} parent=5 // pred_check_branch
        %229 = sbr.rel (%p227) target = $region40
      $region39: #{tpu_custom_call.1} parent=5 // pred_region
        %s230 = ssub.s32 %s15, 2
        // Predicated region
        $region41: #{tpu_custom_call.1} parent=39 // pred_check
          %p231 = pneg %p107
        $region42: #{tpu_custom_call.1} parent=39 // pred_check_branch
          %233 = sbr.rel (%p231) target = $region44
        $region43: #{tpu_custom_call.1} parent=39 // pred_region
          %s234 = sand.u32 %s92, 1
          %s235 = scalar_lea.sflag [#allocation5], %s234
          %s236 = sand.u32 %s92, 1
          %s237 = smul.addr %s236, 8
          %s238 = scalar_lea.vmem [#allocation6], %s237
          %240 = dma.done %s235, 128
        $region44: #{tpu_custom_call.1} parent=39 // pred_fallthru
          _
      $region40: #{tpu_custom_call.1} parent=5 // pred_fallthru
        _
    $region6: #{tpu_custom_call.1} parent=1 // loop_footer
      %s19 = sadd.s32 1, %s15
    $region7: #{tpu_custom_call.1} parent=1 // loop_footer_branch
      %14 = sbr.rel target = $region3
    $region8: #{tpu_custom_call.1} parent=1 // loop_exit
      _
    %241 = vsyncpa [#allocation4], 1
    %s242 = scalar_lea.sflag [#allocation4], 1
    %243 = vsyncpa %s242, 1
    %244 = vsyncpa [#allocation5], 1
    %s245 = scalar_lea.sflag [#allocation5], 1
    %246 = vsyncpa %s245, 1

</llo_original>
